<compile_context>
chip_gen: v6e
topology: v6e:2x2x1
jax: 0.10.0
libtpu: 0.0.40
codegen_flags: <defaults>
</compile_context>

<pallas_src>
import jax
import jax.numpy as jnp
from jax.experimental import pallas as pl
from jax.experimental.pallas import tpu as pltpu


def _autoencoder_kernel(x_ref, w1_ref, b1_ref, w2_ref, b2_ref, o_ref):
    # Encoder: Linear (bf16 MXU operands, f32 accumulation) + bias + ReLU in f32.
    h = jnp.dot(x_ref[...], w1_ref[...], preferred_element_type=jnp.float32)
    h = jnp.maximum(h + b1_ref[...], 0.0)          # b1 is [1, L] f32, broadcasts over rows

    # Decoder: Linear (bf16 operands, f32 accumulation) + bias + Sigmoid in f32.
    y = jnp.dot(h.astype(w2_ref.dtype), w2_ref[...],
                preferred_element_type=jnp.float32)
    y = y + b2_ref[...]                            # b2 is [1, F] f32
    o_ref[...] = jax.nn.sigmoid(y).astype(o_ref.dtype)


def autoencoder_forward(x, w1, b1, w2, b2, *, tile_b=256,
                        compute_dtype=jnp.bfloat16, out_dtype=None,
                        vmem_limit_bytes=32 * 1024 * 1024):
    """x: [B, F], w1: [F, L], b1: [L], w2: [L, F], b2: [F] -> [B, F]."""
    B, F = x.shape
    L = w1.shape[1]
    if out_dtype is None:
        out_dtype = x.dtype

    # Batch tile: large enough to fill the MXU and amortize per-step overhead, clamped
    # to B and kept a multiple of 16 (bf16 sublane packing). Batch is padded up to a
    # multiple of the tile; padded rows are sliced off after the call.
    tile_b = max(16, (min(tile_b, B) // 16) * 16)
    b_pad = pl.cdiv(B, tile_b) * tile_b

    x_c = x.astype(compute_dtype)
    if b_pad != B:
        x_c = jnp.pad(x_c, ((0, b_pad - B), (0, 0)))
    w1_c = w1.astype(compute_dtype)
    w2_c = w2.astype(compute_dtype)
    b1_2d = b1.astype(jnp.float32).reshape(1, L)   # f32 epilogue (v5e: no bf16 VPU/EUP)
    b2_2d = b2.astype(jnp.float32).reshape(1, F)

    resident = lambda i: (0, 0)   # weights/biases stay resident across the batch grid
    # NOTE: for large F*L, additionally single-buffer the resident weight BlockSpecs
    # (pipeline_mode=pl.Buffered(1)) and/or tile w2's output columns on a second grid
    # axis to stay within v7x's 64 MiB VMEM; unnecessary at these sizes (~64 KiB each).

    out = pl.pallas_call(
        _autoencoder_kernel,
        out_shape=jax.ShapeDtypeStruct((b_pad, F), out_dtype),
        grid_spec=pltpu.PrefetchScalarGridSpec(
            num_scalar_prefetch=0,
            grid=(b_pad // tile_b,),
            in_specs=[
                pl.BlockSpec((tile_b, F), lambda i: (i, 0)),   # x batch tile
                pl.BlockSpec((F, L), resident),                # w1 (resident)
                pl.BlockSpec((1, L), resident),                # b1
                pl.BlockSpec((L, F), resident),                # w2 (resident)
                pl.BlockSpec((1, F), resident),                # b2
            ],
            out_specs=pl.BlockSpec((tile_b, F), lambda i: (i, 0)),
        ),
        compiler_params=pltpu.CompilerParams(
            dimension_semantics=("parallel",),       # batch tiles shard across v7x TCs
            vmem_limit_bytes=vmem_limit_bytes),
    )(x_c, w1_c, b1_2d, w2_c, b2_2d)

    if b_pad != B:
        out = out[:B]
    return out


def _init_params(key, in_features, latent_size, dtype=jnp.float32):
    """Deterministic init mirroring nn.Linear default (uniform +-1/sqrt(fan_in))."""
    k1, k2, k3, k4 = jax.random.split(key, 4)
    bound1 = 1.0 / (in_features ** 0.5)
    bound2 = 1.0 / (latent_size ** 0.5)
    # stored already transposed for the [B,F] @ [F,L] layout used in the kernel
    w1 = jax.random.uniform(k1, (in_features, latent_size), dtype, -bound1, bound1)
    b1 = jax.random.uniform(k2, (latent_size,), dtype, -bound1, bound1)
    w2 = jax.random.uniform(k3, (latent_size, in_features), dtype, -bound2, bound2)
    b2 = jax.random.uniform(k4, (in_features,), dtype, -bound2, bound2)
    return w1, b1, w2, b2


def _reference(x, w1, b1, w2, b2):
    h = jnp.maximum(x @ w1 + b1, 0.0)
    return jax.nn.sigmoid(h @ w2 + b2)


if __name__ == "__main__":
    batch = 512          # -> grid of 2 tiles of 256 rows: both v7x TensorCores busy
    in_features = 256
    latent_size = 128

    key = jax.random.PRNGKey(0)
    kx, kp = jax.random.split(key)
    x = jax.random.normal(kx, (batch, in_features), jnp.float32)
    w1, b1, w2, b2 = _init_params(kp, in_features, latent_size)

    out = autoencoder_forward(x, w1, b1, w2, b2, tile_b=256)
    out = jax.block_until_ready(out)

    ref = _reference(x, w1, b1, w2, b2)
    assert out.shape == (batch, in_features)
    assert out.dtype == x.dtype
    # bf16 MXU operands with f32 accumulation: tolerance loosened vs f32 reference.
    assert jnp.allclose(out, ref, atol=1e-2, rtol=1e-2), "mismatch vs JAX reference"

    print("KERNEL_OK")
</pallas_src>

<mosaic_0001>
module attributes {stable_mosaic.version = 11 : i64} {
  func.func @_autoencoder_kernel(%arg0: i32, %arg1: memref<256x256xbf16, #tpu.memory_space<vmem>>, %arg2: memref<256x128xbf16, #tpu.memory_space<vmem>>, %arg3: memref<1x128xf32, #tpu.memory_space<vmem>>, %arg4: memref<128x256xbf16, #tpu.memory_space<vmem>>, %arg5: memref<1x256xf32, #tpu.memory_space<vmem>>, %arg6: memref<256x256xf32, #tpu.memory_space<vmem>>) attributes {dimension_semantics = [#tpu.dimension_semantics<parallel>], iteration_bounds = array<i64: 2>, scalar_prefetch = 0 : i64, scratch_operands = 0 : i64, tpu.core_type = #tpu.core_type<tc>, window_params = [{transform_indices = @transform_0, window_bounds = array<i64: 256, 256>}, {pipeline_mode = #tpu.pipeline_mode<synchronous>, transform_indices = @transform_1, window_bounds = array<i64: 256, 128>}, {pipeline_mode = #tpu.pipeline_mode<synchronous>, transform_indices = @transform_2, window_bounds = array<i64: 1, 128>}, {pipeline_mode = #tpu.pipeline_mode<synchronous>, transform_indices = @transform_3, window_bounds = array<i64: 128, 256>}, {pipeline_mode = #tpu.pipeline_mode<synchronous>, transform_indices = @transform_4, window_bounds = array<i64: 1, 256>}, {transform_indices = @transform_5, window_bounds = array<i64: 256, 256>}]} {
    %c0 = arith.constant 0 : index
    %c0_0 = arith.constant 0 : index
    %0 = vector.load %arg1[%c0, %c0_0] : memref<256x256xbf16, #tpu.memory_space<vmem>>, vector<256x256xbf16>
    %c0_1 = arith.constant 0 : index
    %c0_2 = arith.constant 0 : index
    %1 = vector.load %arg2[%c0_1, %c0_2] : memref<256x128xbf16, #tpu.memory_space<vmem>>, vector<256x128xbf16>
    %cst = arith.constant dense<0.000000e+00> : vector<256x128xf32>
    %2 = tpu.matmul %0, %1, %cst {dimension_numbers = #tpu.dot_dimension_numbers<[1], [0], [0], [1], [0, 0, 1, 1], [], []>} : vector<256x256xbf16>, vector<256x128xbf16>, vector<256x128xf32> -> vector<256x128xf32>
    %c0_3 = arith.constant 0 : index
    %c0_4 = arith.constant 0 : index
    %3 = vector.load %arg3[%c0_3, %c0_4] : memref<1x128xf32, #tpu.memory_space<vmem>>, vector<1x128xf32>
    %4 = vector.broadcast %3 : vector<1x128xf32> to vector<256x128xf32>
    %5 = arith.addf %2, %4 : vector<256x128xf32>
    %cst_5 = arith.constant 0.000000e+00 : f32
    %6 = vector.broadcast %cst_5 : f32 to vector<256x128xf32>
    %7 = arith.maximumf %5, %6 : vector<256x128xf32>
    %8 = arith.truncf %7 : vector<256x128xf32> to vector<256x128xbf16>
    %c0_6 = arith.constant 0 : index
    %c0_7 = arith.constant 0 : index
    %9 = vector.load %arg4[%c0_6, %c0_7] : memref<128x256xbf16, #tpu.memory_space<vmem>>, vector<128x256xbf16>
    %cst_8 = arith.constant dense<0.000000e+00> : vector<256x256xf32>
    %10 = tpu.matmul %8, %9, %cst_8 {dimension_numbers = #tpu.dot_dimension_numbers<[1], [0], [0], [1], [0, 0, 1, 1], [], []>} : vector<256x128xbf16>, vector<128x256xbf16>, vector<256x256xf32> -> vector<256x256xf32>
    %c0_9 = arith.constant 0 : index
    %c0_10 = arith.constant 0 : index
    %11 = vector.load %arg5[%c0_9, %c0_10] : memref<1x256xf32, #tpu.memory_space<vmem>>, vector<1x256xf32>
    %12 = vector.broadcast %11 : vector<1x256xf32> to vector<256x256xf32>
    %13 = arith.addf %10, %12 : vector<256x256xf32>
    %14 = arith.negf %13 : vector<256x256xf32>
    %15 = math.exp %14 : vector<256x256xf32>
    %cst_11 = arith.constant 1.000000e+00 : f32
    %16 = vector.broadcast %cst_11 : f32 to vector<256x256xf32>
    %17 = arith.addf %16, %15 : vector<256x256xf32>
    %18 = arith.divf %16, %17 : vector<256x256xf32>
    %c0_12 = arith.constant 0 : index
    %c0_13 = arith.constant 0 : index
    %19 = vector.load %arg6[%c0_12, %c0_13] : memref<256x256xf32, #tpu.memory_space<vmem>>, vector<256x256xf32>
    tpu.vector_store %arg6[%c0_12, %c0_13], %18 {strides = array<i32>} : memref<256x256xf32, #tpu.memory_space<vmem>>, vector<256x256xf32>,
    return
  }
  func.func @transform_0(%arg0: i32) -> (i32, i32) {
    %c0_i32 = arith.constant 0 : i32
    %c0_i32_0 = arith.constant 0 : i32
    return %arg0, %c0_i32 : i32, i32
  }
  func.func @transform_1(%arg0: i32) -> (i32, i32) {
    %c0_i32 = arith.constant 0 : i32
    %c0_i32_0 = arith.constant 0 : i32
    %c0_i32_1 = arith.constant 0 : i32
    return %c0_i32, %c0_i32_0 : i32, i32
  }
  func.func @transform_2(%arg0: i32) -> (i32, i32) {
    %c0_i32 = arith.constant 0 : i32
    %c0_i32_0 = arith.constant 0 : i32
    %c0_i32_1 = arith.constant 0 : i32
    return %c0_i32, %c0_i32_0 : i32, i32
  }
  func.func @transform_3(%arg0: i32) -> (i32, i32) {
    %c0_i32 = arith.constant 0 : i32
    %c0_i32_0 = arith.constant 0 : i32
    %c0_i32_1 = arith.constant 0 : i32
    return %c0_i32, %c0_i32_0 : i32, i32
  }
  func.func @transform_4(%arg0: i32) -> (i32, i32) {
    %c0_i32 = arith.constant 0 : i32
    %c0_i32_0 = arith.constant 0 : i32
    %c0_i32_1 = arith.constant 0 : i32
    return %c0_i32, %c0_i32_0 : i32, i32
  }
  func.func @transform_5(%arg0: i32) -> (i32, i32) {
    %c0_i32 = arith.constant 0 : i32
    %c0_i32_0 = arith.constant 0 : i32
    return %arg0, %c0_i32 : i32, i32
  }
}

</mosaic_0001>

<llo_original>
// kernel: tpu_custom_call.1
$region0: #{tpu_custom_call.1}
  #allocation0 [shape = 'u32[]', space=smem, size = 0x4, offset = 0x4, fixed_abs, tag = 'smem constant byte address 0x4 - core index']
  #allocation1 [shape = 'u32[144,128]{1,0:T(1,128)}', space=vmem, size = 0x12000, scoped, tag = 'internal scratch']
  %s0 = inlined_call_operand.hbm [shape: bf16[512,256], index: 0, kind: input, shape index: {}]
  %s1 = inlined_call_operand.hbm [shape: bf16[256,128], index: 1, kind: input, shape index: {}]
  %s2 = inlined_call_operand.vmem [shape: f32[1,128], index: 2, kind: input, shape index: {}]
  %s3 = inlined_call_operand.hbm [shape: bf16[128,256], index: 3, kind: input, shape index: {}]
  %s4 = inlined_call_operand.vmem [shape: f32[1,256], index: 4, kind: input, shape index: {}]
  %s5 = inlined_call_operand.hbm [shape: f32[512,256], index: 5, kind: output, shape index: {}]
  %s6 = sld [smem:[#allocation0]]
  $region65: #{tpu_custom_call.1} parent=0
    _
  %s8 = ssub.s32 1, %s6
  %s9 = scalar_select 0, %s8, %s6
  $region1: #{tpu_custom_call.1} parent=0
    #allocation2 [shape = 'u8[262144]{0}', space=vmem, size = 0x40000, scoped, tag = 'input window, operand 0']
    #allocation3 [shape = 's32[2]{0}', space=sflag, size = 0x8, scoped, tag = 'scoped memory for tpu_custom_call.1']
    #allocation4 [shape = 's32[2]{0}', space=sflag, size = 0x8, scoped, tag = 'scoped memory for tpu_custom_call.1']
    #allocation5 [shape = 'u8[65536]{0}', space=vmem, size = 0x10000, scoped, tag = 'input window, operand 1, single buffered']
    #allocation6 [shape = 's32[1]{0}', space=sflag, size = 0x4, scoped, tag = 'scoped memory for tpu_custom_call.1']
    #allocation7 [shape = 'u8[65536]{0}', space=vmem, size = 0x10000, scoped, tag = 'input window, operand 3, single buffered']
    #allocation8 [shape = 'u8[524288]{0}', space=vmem, size = 0x80000, scoped, tag = 'output window, operand 0']
    %10 = vsyncpa [#allocation3], 0
    %s11 = scalar_lea.sflag [#allocation3], 1
    %12 = vsyncpa %s11, 0
    %13 = vsyncpa [#allocation6], 0
    %14 = vsyncpa [#allocation4], 0
    %s15 = scalar_lea.sflag [#allocation4], 1
    %16 = vsyncpa %s15, 0
    loop: start=0, step=1, limit=4
    $region2: #{tpu_custom_call.1} parent=1 // loop_pre_header
      _
    $region3: #{tpu_custom_call.1} parent=1 // loop_header
      %s18 = sphi 0, %s22
      %p19 = scmp.ge.s32.totalorder %s18, 4
      %s28 = sphi 0, %s30
      %s31 = sphi 0, %s28
      %s32 = sphi 0, %s31
      %s48 = sphi 0, %s32
      %s52 = sphi 0, %s52
      %s54 = sphi 0, %s52
      %s55 = sphi 0, %s54
      %s69 = sphi 0, %s55
      %s73 = sphi 0, %s73
      %s75 = sphi 0, %s73
      %s76 = sphi 0, %s75
      %s90 = sphi 0, %s76
      %s94 = sphi 0, %s94
      %s96 = sphi 0, %s94
      %s97 = sphi 0, %s96
      %s111 = sphi 0, %s97
      %s115 = sphi 0, %s115
      %s117 = sphi 0, %s115
      %s118 = sphi 0, %s117
      %s132 = sphi 0, %s118
      %s138 = sphi 0, %s140
      %s141 = sphi 0, %s138
      %s142 = sphi 0, %s141
      %s158 = sphi 0, %s142
    $region4: #{tpu_custom_call.1} parent=1 // loop_header_branch
      %21 = sbr.rel (%p19) target = $region8
    $region5: #{tpu_custom_call.1} parent=1 // loop_body
      %s23 = ssub.s32 %s18, 1
      %s24 = ssub.s32 %s18, 2
      %s25 = sadd.s32 %s18, 1
      %s26 = ssub.s32 %s18, %s25
      %p27 = scmp.eq.s32.totalorder %s26, 0
      %s29 = sadd.s32 %s28, 1
      %s30 = scalar_select %p27, %s28, %s29
      %p33 = pneg %p27
      %p34 = scmp.eq.s32.totalorder %s18, 1
      %p35 = por %p33, %p34
      %p36 = scmp.ne.s32.totalorder %s28, %s31
      %p37 = scmp.eq.s32.totalorder %s18, 0
      %p38 = por %p36, %p37
      %p39 = scmp.ne.s32.totalorder %s28, %s31
      %p40 = scmp.eq.s32.totalorder %s23, 1
      %p41 = por %p39, %p40
      %p42 = scmp.ne.s32.totalorder %s31, %s32
      %p43 = scmp.eq.s32.totalorder %s23, 0
      %p44 = por %p42, %p43
      %p45 = scmp.ne.s32.totalorder %s31, %s32
      %p46 = scmp.eq.s32.totalorder %s24, 1
      %p47 = por %p45, %p46
      %p49 = scmp.ne.s32.totalorder %s32, %s48
      %p50 = scmp.eq.s32.totalorder %s24, 0
      %p51 = por %p49, %p50
      %s53 = sadd.s32 %s52, 1
      %p56 = scmp.eq.s32.totalorder %s18, 1
      %p57 = scmp.ne.s32.totalorder %s52, %s54
      %p58 = scmp.eq.s32.totalorder %s18, 0
      %p59 = por %p57, %p58
      %p60 = scmp.ne.s32.totalorder %s52, %s54
      %p61 = scmp.eq.s32.totalorder %s23, 1
      %p62 = por %p60, %p61
      %p63 = scmp.ne.s32.totalorder %s54, %s55
      %p64 = scmp.eq.s32.totalorder %s23, 0
      %p65 = por %p63, %p64
      %p66 = scmp.ne.s32.totalorder %s54, %s55
      %p67 = scmp.eq.s32.totalorder %s24, 1
      %p68 = por %p66, %p67
      %p70 = scmp.ne.s32.totalorder %s55, %s69
      %p71 = scmp.eq.s32.totalorder %s24, 0
      %p72 = por %p70, %p71
      %s74 = sadd.s32 %s73, 1
      %p77 = scmp.eq.s32.totalorder %s18, 1
      %p78 = scmp.ne.s32.totalorder %s73, %s75
      %p79 = scmp.eq.s32.totalorder %s18, 0
      %p80 = por %p78, %p79
      %p81 = scmp.ne.s32.totalorder %s73, %s75
      %p82 = scmp.eq.s32.totalorder %s23, 1
      %p83 = por %p81, %p82
      %p84 = scmp.ne.s32.totalorder %s75, %s76
      %p85 = scmp.eq.s32.totalorder %s23, 0
      %p86 = por %p84, %p85
      %p87 = scmp.ne.s32.totalorder %s75, %s76
      %p88 = scmp.eq.s32.totalorder %s24, 1
      %p89 = por %p87, %p88
      %p91 = scmp.ne.s32.totalorder %s76, %s90
      %p92 = scmp.eq.s32.totalorder %s24, 0
      %p93 = por %p91, %p92
      %s95 = sadd.s32 %s94, 1
      %p98 = scmp.eq.s32.totalorder %s18, 1
      %p99 = scmp.ne.s32.totalorder %s94, %s96
      %p100 = scmp.eq.s32.totalorder %s18, 0
      %p101 = por %p99, %p100
      %p102 = scmp.ne.s32.totalorder %s94, %s96
      %p103 = scmp.eq.s32.totalorder %s23, 1
      %p104 = por %p102, %p103
      %p105 = scmp.ne.s32.totalorder %s96, %s97
      %p106 = scmp.eq.s32.totalorder %s23, 0
      %p107 = por %p105, %p106
      %p108 = scmp.ne.s32.totalorder %s96, %s97
      %p109 = scmp.eq.s32.totalorder %s24, 1
      %p110 = por %p108, %p109
      %p112 = scmp.ne.s32.totalorder %s97, %s111
      %p113 = scmp.eq.s32.totalorder %s24, 0
      %p114 = por %p112, %p113
      %s116 = sadd.s32 %s115, 1
      %p119 = scmp.eq.s32.totalorder %s18, 1
      %p120 = scmp.ne.s32.totalorder %s115, %s117
      %p121 = scmp.eq.s32.totalorder %s18, 0
      %p122 = por %p120, %p121
      %p123 = scmp.ne.s32.totalorder %s115, %s117
      %p124 = scmp.eq.s32.totalorder %s23, 1
      %p125 = por %p123, %p124
      %p126 = scmp.ne.s32.totalorder %s117, %s118
      %p127 = scmp.eq.s32.totalorder %s23, 0
      %p128 = por %p126, %p127
      %p129 = scmp.ne.s32.totalorder %s117, %s118
      %p130 = scmp.eq.s32.totalorder %s24, 1
      %p131 = por %p129, %p130
      %p133 = scmp.ne.s32.totalorder %s118, %s132
      %p134 = scmp.eq.s32.totalorder %s24, 0
      %p135 = por %p133, %p134
      %s136 = ssub.s32 %s18, %s25
      %p137 = scmp.eq.s32.totalorder %s136, 0
      %s139 = sadd.s32 %s138, 1
      %s140 = scalar_select %p137, %s138, %s139
      %p143 = pneg %p137
      %p144 = scmp.eq.s32.totalorder %s18, 1
      %p145 = por %p143, %p144
      %p146 = scmp.ne.s32.totalorder %s138, %s141
      %p147 = scmp.eq.s32.totalorder %s18, 0
      %p148 = por %p146, %p147
      %p149 = scmp.ne.s32.totalorder %s138, %s141
      %p150 = scmp.eq.s32.totalorder %s23, 1
      %p151 = por %p149, %p150
      %p152 = scmp.ne.s32.totalorder %s141, %s142
      %p153 = scmp.eq.s32.totalorder %s23, 0
      %p154 = por %p152, %p153
      %p155 = scmp.ne.s32.totalorder %s141, %s142
      %p156 = scmp.eq.s32.totalorder %s24, 1
      %p157 = por %p155, %p156
      %p159 = scmp.ne.s32.totalorder %s142, %s158
      %p160 = scmp.eq.s32.totalorder %s24, 0
      %p161 = por %p159, %p160
      %p162 = scmp.le.s32.totalorder 1, %s18
      %p163 = scmp.lt.s32.totalorder %s18, 3
      %p164 = pnand %p162, %p163
      %p165 = pneg %p164
      // Predicated region
      $region9: #{tpu_custom_call.1} parent=5 // pred_check
        _
      $region10: #{tpu_custom_call.1} parent=5 // pred_check_branch
        %167 = sbr.rel (%p164) target = $region12
      $region11: #{tpu_custom_call.1} parent=5 // pred_region
        %s168 = ssub.s32 %s18, 1
        // Predicated region
        $region13: #{tpu_custom_call.1} parent=11 // pred_check
          %p169 = pneg %p65
        $region14: #{tpu_custom_call.1} parent=11 // pred_check_branch
          %171 = sbr.rel (%p169) target = $region16
        $region15: #{tpu_custom_call.1} parent=11 // pred_region
          %s173 = ssub.s32 2048, 2048
          %174 = vsyncadd [#allocation6], %s173
          %s175 = sshll.u32 [#allocation5], 4
          %s176 = int_to_ptr.vmem [resolvable:$true] %s175
          %181 = dma.hbm_to_vmem [thread:$0]  %s1, 2048, %s176, [#allocation6], 64, 64, 4
        $region16: #{tpu_custom_call.1} parent=11 // pred_fallthru
          _
        // Predicated region
        $region17: #{tpu_custom_call.1} parent=11 // pred_check
          %p182 = pneg %p86
        $region18: #{tpu_custom_call.1} parent=11 // pred_check_branch
          %184 = sbr.rel (%p182) target = $region20
        $region19: #{tpu_custom_call.1} parent=11 // pred_region
          _
        $region20: #{tpu_custom_call.1} parent=11 // pred_fallthru
          _
        // Predicated region
        $region21: #{tpu_custom_call.1} parent=11 // pred_check
          %p185 = pneg %p107
        $region22: #{tpu_custom_call.1} parent=11 // pred_check_branch
          %187 = sbr.rel (%p185) target = $region24
        $region23: #{tpu_custom_call.1} parent=11 // pred_region
          %s189 = ssub.s32 2048, 2048
          %190 = vsyncadd [#allocation6], %s189
          %s191 = sshll.u32 [#allocation7], 4
          %s192 = int_to_ptr.vmem [resolvable:$true] %s191
          %197 = dma.hbm_to_vmem [thread:$0]  %s3, 2048, %s192, [#allocation6], 128, 128, 8
        $region24: #{tpu_custom_call.1} parent=11 // pred_fallthru
          _
        // Predicated region
        $region25: #{tpu_custom_call.1} parent=11 // pred_check
          %p198 = pneg %p128
        $region26: #{tpu_custom_call.1} parent=11 // pred_check_branch
          %200 = sbr.rel (%p198) target = $region28
        $region27: #{tpu_custom_call.1} parent=11 // pred_region
          _
        $region28: #{tpu_custom_call.1} parent=11 // pred_fallthru
          _
      $region12: #{tpu_custom_call.1} parent=5 // pred_fallthru
        _
      %p201 = scmp.lt.s32.totalorder %s18, 2
      // Predicated region
      $region29: #{tpu_custom_call.1} parent=5 // pred_check
        %p202 = pneg %p201
      $region30: #{tpu_custom_call.1} parent=5 // pred_check_branch
        %204 = sbr.rel (%p202) target = $region32
      $region31: #{tpu_custom_call.1} parent=5 // pred_region
        // Predicated region
        $region33: #{tpu_custom_call.1} parent=31 // pred_check
          %p205 = pneg %p38
        $region34: #{tpu_custom_call.1} parent=31 // pred_check_branch
          %207 = sbr.rel (%p205) target = $region36
        $region35: #{tpu_custom_call.1} parent=31 // pred_region
          %s208 = sand.u32 %s28, 1
          %s209 = scalar_lea.sflag [#allocation3], %s208
          %s210 = sand.u32 %s28, 1
          %s211 = smul.addr %s210, 256
          %s212 = scalar_lea.vmem [#allocation2], %s211
          %s213 = smul.u32 32, %s18
          %s215 = ssub.s32 4096, 4096
          %216 = vsyncadd %s209, %s215
          %s217 = smul.addr %s213, 2
          %s218 = smul.addr %s217, 64
          %s219 = scalar_lea.hbm %s0, %s218
          %s220 = sshll.u32 %s212, 4
          %s221 = int_to_ptr.vmem [resolvable:$true] %s220
          %226 = dma.hbm_to_vmem [thread:$0]  %s219, 4096, %s221, %s209, 128, 128, 8
        $region36: #{tpu_custom_call.1} parent=31 // pred_fallthru
          _
      $region32: #{tpu_custom_call.1} parent=5 // pred_fallthru
        _
      %p227 = scmp.le.s32.totalorder 1, %s18
      %p228 = scmp.lt.s32.totalorder %s18, 3
      %p229 = pnand %p227, %p228
      %p230 = pneg %p229
      // Predicated region
      $region37: #{tpu_custom_call.1} parent=5 // pred_check
        _
      $region38: #{tpu_custom_call.1} parent=5 // pred_check_branch
        %232 = sbr.rel (%p229) target = $region40
      $region39: #{tpu_custom_call.1} parent=5 // pred_region
        %s233 = ssub.s32 %s18, 1
        %s234 = sand.u32 %s31, 1
        %s235 = scalar_lea.sflag [#allocation3], %s234
        %s236 = sand.u32 %s31, 1
        %s237 = smul.addr %s236, 256
        %s238 = scalar_lea.vmem [#allocation2], %s237
        // Predicated region
        $region41: #{tpu_custom_call.1} parent=39 // pred_check
          %p239 = pneg %p44
        $region42: #{tpu_custom_call.1} parent=39 // pred_check_branch
          %241 = sbr.rel (%p239) target = $region44
        $region43: #{tpu_custom_call.1} parent=39 // pred_region
          %242 = dma.done %s235, 4096
        $region44: #{tpu_custom_call.1} parent=39 // pred_fallthru
          _
        // Predicated region
        $region45: #{tpu_custom_call.1} parent=39 // pred_check
          %p243 = pneg %p65
        $region46: #{tpu_custom_call.1} parent=39 // pred_check_branch
          %245 = sbr.rel (%p243) target = $region48
        $region47: #{tpu_custom_call.1} parent=39 // pred_region
          %246 = dma.done [#allocation6], 2048
        $region48: #{tpu_custom_call.1} parent=39 // pred_fallthru
          _
        // Predicated region
        $region49: #{tpu_custom_call.1} parent=39 // pred_check
          %p247 = pneg %p107
        $region50: #{tpu_custom_call.1} parent=39 // pred_check_branch
          %249 = sbr.rel (%p247) target = $region52
        $region51: #{tpu_custom_call.1} parent=39 // pred_region
          %250 = dma.done [#allocation6], 2048
        $region52: #{tpu_custom_call.1} parent=39 // pred_fallthru
          _
        %s251 = sand.u32 %s31, 1
        %s252 = scalar_lea.sflag [#allocation3], %s251
        %s253 = sand.u32 %s31, 1
        %s254 = smul.addr %s253, 256
        %s255 = scalar_lea.vmem [#allocation2], %s254
        %p256 = pneg %p44
        %p257 = pneg %p41
        %p258 = pneg %p65
        %p259 = pneg %p62
        %p260 = pneg %p86
        %p261 = pneg %p83
        %p262 = pneg %p107
        %p263 = pneg %p104
        %p264 = pneg %p128
        %p265 = pneg %p125
        %p266 = pneg %p154
        %p267 = pneg %p151
        %s268 = sand.u32 %s141, 1
        %s269 = scalar_lea.sflag [#allocation4], %s268
        %s270 = sand.u32 %s141, 1
        %s271 = smul.addr %s270, 512
        %s272 = scalar_lea.vmem [#allocation8], %s271
        %s273 = smul.u32 32, %s23
        %s274 = smul.u32 32, %s23
        %v276 = vld [vmem:[%s238] sm:$0xff]
        %v277 = vld [vmem:[%s238 + $0x8] sm:$0xff]
        %v278 = vld [vmem:[%s238 + $0x10] sm:$0xff]
        %v279 = vld [vmem:[%s238 + $0x18] sm:$0xff]
        %v280 = vld [vmem:[%s238 + $0x20] sm:$0xff]
        %v281 = vld [vmem:[%s238 + $0x28] sm:$0xff]
        %v282 = vld [vmem:[%s238 + $0x30] sm:$0xff]
        %v283 = vld [vmem:[%s238 + $0x38] sm:$0xff]
        %v284 = vld [vmem:[%s238 + $0x40] sm:$0xff]
        %v285 = vld [vmem:[%s238 + $0x48] sm:$0xff]
        %v286 = vld [vmem:[%s238 + $0x50] sm:$0xff]
        %v287 = vld [vmem:[%s238 + $0x58] sm:$0xff]
        %v288 = vld [vmem:[%s238 + $0x60] sm:$0xff]
        %v289 = vld [vmem:[%s238 + $0x68] sm:$0xff]
        %v290 = vld [vmem:[%s238 + $0x70] sm:$0xff]
        %v291 = vld [vmem:[%s238 + $0x78] sm:$0xff]
        %v292 = vld [vmem:[%s238 + $0x80] sm:$0xff]
        %v293 = vld [vmem:[%s238 + $0x88] sm:$0xff]
        %v294 = vld [vmem:[%s238 + $0x90] sm:$0xff]
        %v295 = vld [vmem:[%s238 + $0x98] sm:$0xff]
        %v296 = vld [vmem:[%s238 + $0xa0] sm:$0xff]
        %v297 = vld [vmem:[%s238 + $0xa8] sm:$0xff]
        %v298 = vld [vmem:[%s238 + $0xb0] sm:$0xff]
        %v299 = vld [vmem:[%s238 + $0xb8] sm:$0xff]
        %v300 = vld [vmem:[%s238 + $0xc0] sm:$0xff]
        %v301 = vld [vmem:[%s238 + $0xc8] sm:$0xff]
        %v302 = vld [vmem:[%s238 + $0xd0] sm:$0xff]
        %v303 = vld [vmem:[%s238 + $0xd8] sm:$0xff]
        %v304 = vld [vmem:[%s238 + $0xe0] sm:$0xff]
        %v305 = vld [vmem:[%s238 + $0xe8] sm:$0xff]
        %v306 = vld [vmem:[%s238 + $0xf0] sm:$0xff]
        %v307 = vld [vmem:[%s238 + $0xf8] sm:$0xff]
        %v308 = vld [vmem:[#allocation5] sm:$0xf]
        %v309 = vld [vmem:[#allocation5 + $0x4] sm:$0xf]
        %v310 = vld [vmem:[#allocation5 + $0x8] sm:$0xf]
        %v311 = vld [vmem:[#allocation5 + $0xc] sm:$0xf]
        %v312 = vld [vmem:[#allocation5 + $0x10] sm:$0xf]
        %v313 = vld [vmem:[#allocation5 + $0x14] sm:$0xf]
        %v314 = vld [vmem:[#allocation5 + $0x18] sm:$0xf]
        %v315 = vld [vmem:[#allocation5 + $0x1c] sm:$0xf]
        %v316 = vld [vmem:[#allocation5 + $0x20] sm:$0xf]
        %v317 = vld [vmem:[#allocation5 + $0x24] sm:$0xf]
        %v318 = vld [vmem:[#allocation5 + $0x28] sm:$0xf]
        %v319 = vld [vmem:[#allocation5 + $0x2c] sm:$0xf]
        %v320 = vld [vmem:[#allocation5 + $0x30] sm:$0xf]
        %v321 = vld [vmem:[#allocation5 + $0x34] sm:$0xf]
        %v322 = vld [vmem:[#allocation5 + $0x38] sm:$0xf]
        %v323 = vld [vmem:[#allocation5 + $0x3c] sm:$0xf]
        %v324 = vld [vmem:[#allocation5 + $0x40] sm:$0xf]
        %v325 = vld [vmem:[#allocation5 + $0x44] sm:$0xf]
        %v326 = vld [vmem:[#allocation5 + $0x48] sm:$0xf]
        %v327 = vld [vmem:[#allocation5 + $0x4c] sm:$0xf]
        %v328 = vld [vmem:[#allocation5 + $0x50] sm:$0xf]
        %v329 = vld [vmem:[#allocation5 + $0x54] sm:$0xf]
        %v330 = vld [vmem:[#allocation5 + $0x58] sm:$0xf]
        %v331 = vld [vmem:[#allocation5 + $0x5c] sm:$0xf]
        %v332 = vld [vmem:[#allocation5 + $0x60] sm:$0xf]
        %v333 = vld [vmem:[#allocation5 + $0x64] sm:$0xf]
        %v334 = vld [vmem:[#allocation5 + $0x68] sm:$0xf]
        %v335 = vld [vmem:[#allocation5 + $0x6c] sm:$0xf]
        %v336 = vld [vmem:[#allocation5 + $0x70] sm:$0xf]
        %v337 = vld [vmem:[#allocation5 + $0x74] sm:$0xf]
        %v338 = vld [vmem:[#allocation5 + $0x78] sm:$0xf]
        %v339 = vld [vmem:[#allocation5 + $0x7c] sm:$0xf]
        %v340 = vld [vmem:[%s2] sm:$0x1]
        %v342 = vlaneseq
        %v343 = vshrl.u32 %v342, 7
        %v344 = vsub.s32 0, %v343
        %v345 = vrot.slane %v340, %v344
        %v379 = vunpack.c.l.b16 %v276
        %v380 = vunpack.c.h.b16 %v276
        %v381 = vunpack.c.l.b16 %v277
        %v382 = vunpack.c.h.b16 %v277
        %v383 = vunpack.c.l.b16 %v278
        %v384 = vunpack.c.h.b16 %v278
        %v385 = vunpack.c.l.b16 %v279
        %v386 = vunpack.c.h.b16 %v279
        %v387 = vunpack.c.l.b16 %v280
        %v388 = vunpack.c.h.b16 %v280
        %v389 = vunpack.c.l.b16 %v281
        %v390 = vunpack.c.h.b16 %v281
        %v391 = vunpack.c.l.b16 %v282
        %v392 = vunpack.c.h.b16 %v282
        %v393 = vunpack.c.l.b16 %v283
        %v394 = vunpack.c.h.b16 %v283
        %v395 = vunpack.c.l.b16 %v284
        %v396 = vunpack.c.h.b16 %v284
        %v397 = vunpack.c.l.b16 %v285
        %v398 = vunpack.c.h.b16 %v285
        %v399 = vunpack.c.l.b16 %v286
        %v400 = vunpack.c.h.b16 %v286
        %v401 = vunpack.c.l.b16 %v287
        %v402 = vunpack.c.h.b16 %v287
        %v403 = vunpack.c.l.b16 %v288
        %v404 = vunpack.c.h.b16 %v288
        %v405 = vunpack.c.l.b16 %v289
        %v406 = vunpack.c.h.b16 %v289
        %v407 = vunpack.c.l.b16 %v290
        %v408 = vunpack.c.h.b16 %v290
        %v409 = vunpack.c.l.b16 %v291
        %v410 = vunpack.c.h.b16 %v291
        %v411 = vunpack.c.l.b16 %v292
        %v412 = vunpack.c.h.b16 %v292
        %v413 = vunpack.c.l.b16 %v293
        %v414 = vunpack.c.h.b16 %v293
        %v415 = vunpack.c.l.b16 %v294
        %v416 = vunpack.c.h.b16 %v294
        %v417 = vunpack.c.l.b16 %v295
        %v418 = vunpack.c.h.b16 %v295
        %v419 = vunpack.c.l.b16 %v296
        %v420 = vunpack.c.h.b16 %v296
        %v421 = vunpack.c.l.b16 %v297
        %v422 = vunpack.c.h.b16 %v297
        %v423 = vunpack.c.l.b16 %v298
        %v424 = vunpack.c.h.b16 %v298
        %v425 = vunpack.c.l.b16 %v299
        %v426 = vunpack.c.h.b16 %v299
        %v427 = vunpack.c.l.b16 %v300
        %v428 = vunpack.c.h.b16 %v300
        %v429 = vunpack.c.l.b16 %v301
        %v430 = vunpack.c.h.b16 %v301
        %v431 = vunpack.c.l.b16 %v302
        %v432 = vunpack.c.h.b16 %v302
        %v433 = vunpack.c.l.b16 %v303
        %v434 = vunpack.c.h.b16 %v303
        %v435 = vunpack.c.l.b16 %v304
        %v436 = vunpack.c.h.b16 %v304
        %v437 = vunpack.c.l.b16 %v305
        %v438 = vunpack.c.h.b16 %v305
        %v439 = vunpack.c.l.b16 %v306
        %v440 = vunpack.c.h.b16 %v306
        %v441 = vunpack.c.l.b16 %v307
        %v442 = vunpack.c.h.b16 %v307
        %v443 = vpack.c.b16 %v381, %v379
        %v444 = vpack.c.b16 %v382, %v380
        %v445 = vpack.c.b16 %v385, %v383
        %v446 = vpack.c.b16 %v386, %v384
        %v447 = vpack.c.b16 %v389, %v387
        %v448 = vpack.c.b16 %v390, %v388
        %v449 = vpack.c.b16 %v393, %v391
        %v450 = vpack.c.b16 %v394, %v392
        %v451 = vpack.c.b16 %v397, %v395
        %v452 = vpack.c.b16 %v398, %v396
        %v453 = vpack.c.b16 %v401, %v399
        %v454 = vpack.c.b16 %v402, %v400
        %v455 = vpack.c.b16 %v405, %v403
        %v456 = vpack.c.b16 %v406, %v404
        %v457 = vpack.c.b16 %v409, %v407
        %v458 = vpack.c.b16 %v410, %v408
        %v459 = vpack.c.b16 %v413, %v411
        %v460 = vpack.c.b16 %v414, %v412
        %v461 = vpack.c.b16 %v417, %v415
        %v462 = vpack.c.b16 %v418, %v416
        %v463 = vpack.c.b16 %v421, %v419
        %v464 = vpack.c.b16 %v422, %v420
        %v465 = vpack.c.b16 %v425, %v423
        %v466 = vpack.c.b16 %v426, %v424
        %v467 = vpack.c.b16 %v429, %v427
        %v468 = vpack.c.b16 %v430, %v428
        %v469 = vpack.c.b16 %v433, %v431
        %v470 = vpack.c.b16 %v434, %v432
        %v471 = vpack.c.b16 %v437, %v435
        %v472 = vpack.c.b16 %v438, %v436
        %v473 = vpack.c.b16 %v441, %v439
        %v474 = vpack.c.b16 %v442, %v440
        %v539 = vunpack.c.l.b16 %v308
        %v540 = vunpack.c.l.b16 %v309
        %v541 = vunpack.c.l.b16 %v310
        %v542 = vunpack.c.l.b16 %v311
        %v543 = vunpack.c.l.b16 %v312
        %v544 = vunpack.c.l.b16 %v313
        %v545 = vunpack.c.l.b16 %v314
        %v546 = vunpack.c.l.b16 %v315
        %v547 = vunpack.c.l.b16 %v316
        %v548 = vunpack.c.l.b16 %v317
        %v549 = vunpack.c.l.b16 %v318
        %v550 = vunpack.c.l.b16 %v319
        %v551 = vunpack.c.l.b16 %v320
        %v552 = vunpack.c.l.b16 %v321
        %v553 = vunpack.c.l.b16 %v322
        %v554 = vunpack.c.l.b16 %v323
        %v555 = vunpack.c.l.b16 %v324
        %v556 = vunpack.c.l.b16 %v325
        %v557 = vunpack.c.l.b16 %v326
        %v558 = vunpack.c.l.b16 %v327
        %v559 = vunpack.c.l.b16 %v328
        %v560 = vunpack.c.l.b16 %v329
        %v561 = vunpack.c.l.b16 %v330
        %v562 = vunpack.c.l.b16 %v331
        %v563 = vunpack.c.l.b16 %v332
        %v564 = vunpack.c.l.b16 %v333
        %v565 = vunpack.c.l.b16 %v334
        %v566 = vunpack.c.l.b16 %v335
        %v567 = vunpack.c.l.b16 %v336
        %v568 = vunpack.c.l.b16 %v337
        %v569 = vunpack.c.l.b16 %v338
        %v570 = vunpack.c.l.b16 %v339
        %v571 = vpack.c.b16 %v540, %v539
        %v572 = vpack.c.b16 %v542, %v541
        %v573 = vpack.c.b16 %v544, %v543
        %v574 = vpack.c.b16 %v546, %v545
        %v575 = vpack.c.b16 %v548, %v547
        %v576 = vpack.c.b16 %v550, %v549
        %v577 = vpack.c.b16 %v552, %v551
        %v578 = vpack.c.b16 %v554, %v553
        %v579 = vpack.c.b16 %v556, %v555
        %v580 = vpack.c.b16 %v558, %v557
        %v581 = vpack.c.b16 %v560, %v559
        %v582 = vpack.c.b16 %v562, %v561
        %v583 = vpack.c.b16 %v564, %v563
        %v584 = vpack.c.b16 %v566, %v565
        %v585 = vpack.c.b16 %v568, %v567
        %v586 = vpack.c.b16 %v570, %v569
        %603 = vmatprep.subr.bf16.mxu0 0
        %604 = vmatpush1.bf16.msra.mxu0 %v578
        %605 = vmatprep.subr.bf16.mxu0 0
        %606 = vmatpush1.bf16.msra.mxu0 %v577
        %607 = vmatprep.subr.bf16.mxu0 0
        %608 = vmatpush1.bf16.msra.mxu0 %v576
        %609 = vmatprep.subr.bf16.mxu0 0
        %610 = vmatpush1.bf16.msra.mxu0 %v575
        %611 = vmatprep.subr.bf16.mxu0 0
        %612 = vmatpush1.bf16.msra.mxu0 %v574
        %613 = vmatprep.subr.bf16.mxu0 0
        %614 = vmatpush1.bf16.msra.mxu0 %v573
        %615 = vmatprep.subr.bf16.mxu0 0
        %616 = vmatpush1.bf16.msra.mxu0 %v572
        %617 = vmatprep.subr.bf16.mxu0 0
        %618 = vmatpush1.bf16.msra.mxu0 %v571
        %619 = vmatprep.subr.bf16.mxu0 0
        %620 = vmatpush2.bf16.msra.mxu0 %v586
        %621 = vmatprep.subr.bf16.mxu0 0
        %622 = vmatpush2.bf16.msra.mxu0 %v585
        %623 = vmatprep.subr.bf16.mxu0 0
        %624 = vmatpush2.bf16.msra.mxu0 %v584
        %625 = vmatprep.subr.bf16.mxu0 0
        %626 = vmatpush2.bf16.msra.mxu0 %v583
        %627 = vmatprep.subr.bf16.mxu0 0
        %628 = vmatpush2.bf16.msra.mxu0 %v582
        %629 = vmatprep.subr.bf16.mxu0 0
        %630 = vmatpush2.bf16.msra.mxu0 %v581
        %631 = vmatprep.subr.bf16.mxu0 0
        %632 = vmatpush2.bf16.msra.mxu0 %v580
        %633 = vmatprep.subr.bf16.mxu0 0
        %634 = vmatpush2.bf16.msra.mxu0 %v579
        %635 = vmatprep.mubr.bf16.mxu0 %v444
        %636 = vmatmul.mubr.bf16.gmra.mxu0 %v443
        %v637 = vpop.f32.mrf.mxu0
        %v638 = vadd.f32 %v345, %v637
        %v639 = vpop.f32.mrf.mxu0
        %v640 = vpop.f32.mrf.mxu0
        %v641 = vadd.f32 %v345, %v640
        %v642 = vpop.f32.mrf.mxu0
        %643 = vmatprep.mubr.bf16.mxu0 %v446
        %644 = vmatmul.mubr.bf16.gmra.mxu0 %v445
        %v645 = vpop.f32.mrf.mxu0
        %v646 = vadd.f32 %v345, %v645
        %v647 = vpop.f32.mrf.mxu0
        %v648 = vpop.f32.mrf.mxu0
        %v649 = vadd.f32 %v345, %v648
        %v650 = vpop.f32.mrf.mxu0
        %651 = vmatprep.mubr.bf16.mxu0 %v448
        %652 = vmatmul.mubr.bf16.gmra.mxu0 %v447
        %v653 = vpop.f32.mrf.mxu0
        %v654 = vadd.f32 %v345, %v653
        %v655 = vpop.f32.mrf.mxu0
        %v656 = vpop.f32.mrf.mxu0
        %v657 = vadd.f32 %v345, %v656
        %v658 = vpop.f32.mrf.mxu0
        %659 = vmatprep.mubr.bf16.mxu0 %v450
        %660 = vmatmul.mubr.bf16.gmra.mxu0 %v449
        %v661 = vpop.f32.mrf.mxu0
        %v662 = vadd.f32 %v345, %v661
        %v663 = vpop.f32.mrf.mxu0
        %v664 = vpop.f32.mrf.mxu0
        %v665 = vadd.f32 %v345, %v664
        %v666 = vpop.f32.mrf.mxu0
        %667 = vmatprep.mubr.bf16.mxu0 %v452
        %668 = vmatmul.mubr.bf16.gmra.mxu0 %v451
        %v669 = vpop.f32.mrf.mxu0
        %v670 = vadd.f32 %v345, %v669
        %v671 = vpop.f32.mrf.mxu0
        %v672 = vpop.f32.mrf.mxu0
        %v673 = vadd.f32 %v345, %v672
        %v674 = vpop.f32.mrf.mxu0
        %675 = vmatprep.mubr.bf16.mxu0 %v454
        %676 = vmatmul.mubr.bf16.gmra.mxu0 %v453
        %v677 = vpop.f32.mrf.mxu0
        %v678 = vadd.f32 %v345, %v677
        %v679 = vpop.f32.mrf.mxu0
        %v680 = vpop.f32.mrf.mxu0
        %v681 = vadd.f32 %v345, %v680
        %v682 = vpop.f32.mrf.mxu0
        %683 = vmatprep.mubr.bf16.mxu0 %v456
        %684 = vmatmul.mubr.bf16.gmra.mxu0 %v455
        %v685 = vpop.f32.mrf.mxu0
        %v686 = vadd.f32 %v345, %v685
        %v687 = vpop.f32.mrf.mxu0
        %v688 = vpop.f32.mrf.mxu0
        %v689 = vadd.f32 %v345, %v688
        %v690 = vpop.f32.mrf.mxu0
        %691 = vmatprep.mubr.bf16.mxu0 %v458
        %692 = vmatmul.mubr.bf16.gmra.mxu0 %v457
        %v693 = vpop.f32.mrf.mxu0
        %v694 = vadd.f32 %v345, %v693
        %v695 = vpop.f32.mrf.mxu0
        %v696 = vpop.f32.mrf.mxu0
        %v697 = vadd.f32 %v345, %v696
        %v698 = vpop.f32.mrf.mxu0
        %699 = vmatprep.mubr.bf16.mxu0 %v460
        %700 = vmatmul.mubr.bf16.gmra.mxu0 %v459
        %v701 = vpop.f32.mrf.mxu0
        %v702 = vadd.f32 %v345, %v701
        %v703 = vpop.f32.mrf.mxu0
        %v704 = vpop.f32.mrf.mxu0
        %v705 = vadd.f32 %v345, %v704
        %v706 = vpop.f32.mrf.mxu0
        %707 = vmatprep.mubr.bf16.mxu0 %v462
        %708 = vmatmul.mubr.bf16.gmra.mxu0 %v461
        %v709 = vpop.f32.mrf.mxu0
        %v710 = vadd.f32 %v345, %v709
        %v711 = vpop.f32.mrf.mxu0
        %v712 = vpop.f32.mrf.mxu0
        %v713 = vadd.f32 %v345, %v712
        %v714 = vpop.f32.mrf.mxu0
        %715 = vmatprep.mubr.bf16.mxu0 %v464
        %716 = vmatmul.mubr.bf16.gmra.mxu0 %v463
        %v717 = vpop.f32.mrf.mxu0
        %v718 = vadd.f32 %v345, %v717
        %v719 = vpop.f32.mrf.mxu0
        %v720 = vpop.f32.mrf.mxu0
        %v721 = vadd.f32 %v345, %v720
        %v722 = vpop.f32.mrf.mxu0
        %723 = vmatprep.mubr.bf16.mxu0 %v466
        %724 = vmatmul.mubr.bf16.gmra.mxu0 %v465
        %v725 = vpop.f32.mrf.mxu0
        %v726 = vadd.f32 %v345, %v725
        %v727 = vpop.f32.mrf.mxu0
        %v728 = vpop.f32.mrf.mxu0
        %v729 = vadd.f32 %v345, %v728
        %v730 = vpop.f32.mrf.mxu0
        %731 = vmatprep.mubr.bf16.mxu0 %v468
        %732 = vmatmul.mubr.bf16.gmra.mxu0 %v467
        %v733 = vpop.f32.mrf.mxu0
        %v734 = vadd.f32 %v345, %v733
        %v735 = vpop.f32.mrf.mxu0
        %v736 = vpop.f32.mrf.mxu0
        %v737 = vadd.f32 %v345, %v736
        %v738 = vpop.f32.mrf.mxu0
        %739 = vmatprep.mubr.bf16.mxu0 %v470
        %740 = vmatmul.mubr.bf16.gmra.mxu0 %v469
        %v741 = vpop.f32.mrf.mxu0
        %v742 = vadd.f32 %v345, %v741
        %v743 = vpop.f32.mrf.mxu0
        %v744 = vpop.f32.mrf.mxu0
        %v745 = vadd.f32 %v345, %v744
        %v746 = vpop.f32.mrf.mxu0
        %747 = vmatprep.mubr.bf16.mxu0 %v472
        %748 = vmatmul.mubr.bf16.gmra.mxu0 %v471
        %v749 = vpop.f32.mrf.mxu0
        %v750 = vadd.f32 %v345, %v749
        %v751 = vpop.f32.mrf.mxu0
        %v752 = vpop.f32.mrf.mxu0
        %v753 = vadd.f32 %v345, %v752
        %v754 = vpop.f32.mrf.mxu0
        %755 = vmatprep.mubr.bf16.mxu0 %v474
        %756 = vmatmul.mubr.bf16.gmra.mxu0 %v473
        %v757 = vpop.f32.mrf.mxu0
        %v758 = vadd.f32 %v345, %v757
        %v759 = vpop.f32.mrf.mxu0
        %v760 = vpop.f32.mrf.mxu0
        %v761 = vadd.f32 %v345, %v760
        %v762 = vpop.f32.mrf.mxu0
        %763 = vdwg.mxu0
        %v764 = vmax.f32 %v638, 0.0
        %v765 = vmax.f32 %v641, 0.0
        %v766 = vmax.f32 %v646, 0.0
        %v767 = vmax.f32 %v649, 0.0
        %v768 = vmax.f32 %v654, 0.0
        %v769 = vmax.f32 %v657, 0.0
        %v770 = vmax.f32 %v662, 0.0
        %v771 = vmax.f32 %v665, 0.0
        %v772 = vmax.f32 %v670, 0.0
        %v773 = vmax.f32 %v673, 0.0
        %v774 = vmax.f32 %v678, 0.0
        %v775 = vmax.f32 %v681, 0.0
        %v776 = vmax.f32 %v686, 0.0
        %v777 = vmax.f32 %v689, 0.0
        %v778 = vmax.f32 %v694, 0.0
        %v779 = vmax.f32 %v697, 0.0
        %v780 = vmax.f32 %v702, 0.0
        %v781 = vmax.f32 %v705, 0.0
        %v782 = vmax.f32 %v710, 0.0
        %v783 = vmax.f32 %v713, 0.0
        %v784 = vmax.f32 %v718, 0.0
        %v785 = vmax.f32 %v721, 0.0
        %v786 = vmax.f32 %v726, 0.0
        %v787 = vmax.f32 %v729, 0.0
        %v788 = vmax.f32 %v734, 0.0
        %v789 = vmax.f32 %v737, 0.0
        %v790 = vmax.f32 %v742, 0.0
        %v791 = vmax.f32 %v745, 0.0
        %v792 = vmax.f32 %v750, 0.0
        %v793 = vmax.f32 %v753, 0.0
        %v794 = vmax.f32 %v758, 0.0
        %v795 = vmax.f32 %v761, 0.0
        %v796 = vpack.c.bf16 %v765, %v764
        %v797 = vpack.c.bf16 %v767, %v766
        %v798 = vpack.c.bf16 %v769, %v768
        %v799 = vpack.c.bf16 %v771, %v770
        %v800 = vpack.c.bf16 %v773, %v772
        %v801 = vpack.c.bf16 %v775, %v774
        %v802 = vpack.c.bf16 %v777, %v776
        %v803 = vpack.c.bf16 %v779, %v778
        %v804 = vpack.c.bf16 %v781, %v780
        %v805 = vpack.c.bf16 %v783, %v782
        %v806 = vpack.c.bf16 %v785, %v784
        %v807 = vpack.c.bf16 %v787, %v786
        %v808 = vpack.c.bf16 %v789, %v788
        %v809 = vpack.c.bf16 %v791, %v790
        %v810 = vpack.c.bf16 %v793, %v792
        %v811 = vpack.c.bf16 %v795, %v794
        %v812 = vld [vmem:[#allocation7] sm:$0xff]
        %v813 = vld [vmem:[#allocation7 + $0x8] sm:$0xff]
        %v814 = vld [vmem:[#allocation7 + $0x10] sm:$0xff]
        %v815 = vld [vmem:[#allocation7 + $0x18] sm:$0xff]
        %v816 = vld [vmem:[#allocation7 + $0x20] sm:$0xff]
        %v817 = vld [vmem:[#allocation7 + $0x28] sm:$0xff]
        %v818 = vld [vmem:[#allocation7 + $0x30] sm:$0xff]
        %v819 = vld [vmem:[#allocation7 + $0x38] sm:$0xff]
        %v820 = vld [vmem:[#allocation7 + $0x40] sm:$0xff]
        %v821 = vld [vmem:[#allocation7 + $0x48] sm:$0xff]
        %v822 = vld [vmem:[#allocation7 + $0x50] sm:$0xff]
        %v823 = vld [vmem:[#allocation7 + $0x58] sm:$0xff]
        %v824 = vld [vmem:[#allocation7 + $0x60] sm:$0xff]
        %v825 = vld [vmem:[#allocation7 + $0x68] sm:$0xff]
        %v826 = vld [vmem:[#allocation7 + $0x70] sm:$0xff]
        %v827 = vld [vmem:[#allocation7 + $0x78] sm:$0xff]
        %v828 = vld [vmem:[%s4] sm:$0x3]
        %v830 = vlaneseq
        %v831 = vshrl.u32 %v830, 7
        %v832 = vsub.s32 0, %v831
        %v833 = vrot.slane %v828, %v832
        %v834 = vlaneseq
        %v835 = vshrl.u32 %v834, 7
        %v836 = vsub.s32 1, %v835
        %v837 = vrot.slane %v828, %v836
        %v856 = vunpack.c.l.b16 %v812
        %v857 = vunpack.c.h.b16 %v812
        %v858 = vunpack.c.l.b16 %v813
        %v859 = vunpack.c.h.b16 %v813
        %v860 = vunpack.c.l.b16 %v814
        %v861 = vunpack.c.h.b16 %v814
        %v862 = vunpack.c.l.b16 %v815
        %v863 = vunpack.c.h.b16 %v815
        %v864 = vunpack.c.l.b16 %v816
        %v865 = vunpack.c.h.b16 %v816
        %v866 = vunpack.c.l.b16 %v817
        %v867 = vunpack.c.h.b16 %v817
        %v868 = vunpack.c.l.b16 %v818
        %v869 = vunpack.c.h.b16 %v818
        %v870 = vunpack.c.l.b16 %v819
        %v871 = vunpack.c.h.b16 %v819
        %v872 = vunpack.c.l.b16 %v820
        %v873 = vunpack.c.h.b16 %v820
        %v874 = vunpack.c.l.b16 %v821
        %v875 = vunpack.c.h.b16 %v821
        %v876 = vunpack.c.l.b16 %v822
        %v877 = vunpack.c.h.b16 %v822
        %v878 = vunpack.c.l.b16 %v823
        %v879 = vunpack.c.h.b16 %v823
        %v880 = vunpack.c.l.b16 %v824
        %v881 = vunpack.c.h.b16 %v824
        %v882 = vunpack.c.l.b16 %v825
        %v883 = vunpack.c.h.b16 %v825
        %v884 = vunpack.c.l.b16 %v826
        %v885 = vunpack.c.h.b16 %v826
        %v886 = vunpack.c.l.b16 %v827
        %v887 = vunpack.c.h.b16 %v827
        %v888 = vpack.c.b16 %v858, %v856
        %v889 = vpack.c.b16 %v859, %v857
        %v890 = vpack.c.b16 %v862, %v860
        %v891 = vpack.c.b16 %v863, %v861
        %v892 = vpack.c.b16 %v866, %v864
        %v893 = vpack.c.b16 %v867, %v865
        %v894 = vpack.c.b16 %v870, %v868
        %v895 = vpack.c.b16 %v871, %v869
        %v896 = vpack.c.b16 %v874, %v872
        %v897 = vpack.c.b16 %v875, %v873
        %v898 = vpack.c.b16 %v878, %v876
        %v899 = vpack.c.b16 %v879, %v877
        %v900 = vpack.c.b16 %v882, %v880
        %v901 = vpack.c.b16 %v883, %v881
        %v902 = vpack.c.b16 %v886, %v884
        %v903 = vpack.c.b16 %v887, %v885
        %920 = vmatprep.subr.bf16.mxu0 %v903
        %921 = vmatpush1.bf16.msra.mxu0 %v902
        %922 = vmatprep.subr.bf16.mxu0 %v901
        %923 = vmatpush1.bf16.msra.mxu0 %v900
        %924 = vmatprep.subr.bf16.mxu0 %v899
        %925 = vmatpush1.bf16.msra.mxu0 %v898
        %926 = vmatprep.subr.bf16.mxu0 %v897
        %927 = vmatpush1.bf16.msra.mxu0 %v896
        %928 = vmatprep.subr.bf16.mxu0 %v895
        %929 = vmatpush1.bf16.msra.mxu0 %v894
        %930 = vmatprep.subr.bf16.mxu0 %v893
        %931 = vmatpush1.bf16.msra.mxu0 %v892
        %932 = vmatprep.subr.bf16.mxu0 %v891
        %933 = vmatpush1.bf16.msra.mxu0 %v890
        %934 = vmatprep.subr.bf16.mxu0 %v889
        %935 = vmatpush1.bf16.msra.mxu0 %v888
        %936 = vmatprep.subr.bf16.mxu0 0
        %937 = vmatpush2.bf16.msra.mxu0 0
        %938 = vmatprep.subr.bf16.mxu0 0
        %939 = vmatpush2.bf16.msra.mxu0 0
        %940 = vmatprep.subr.bf16.mxu0 0
        %941 = vmatpush2.bf16.msra.mxu0 0
        %942 = vmatprep.subr.bf16.mxu0 0
        %943 = vmatpush2.bf16.msra.mxu0 0
        %944 = vmatprep.subr.bf16.mxu0 0
        %945 = vmatpush2.bf16.msra.mxu0 0
        %946 = vmatprep.subr.bf16.mxu0 0
        %947 = vmatpush2.bf16.msra.mxu0 0
        %948 = vmatprep.subr.bf16.mxu0 0
        %949 = vmatpush2.bf16.msra.mxu0 0
        %950 = vmatprep.subr.bf16.mxu0 0
        %951 = vmatpush2.bf16.msra.mxu0 0
        %952 = vmatprep.mubr.bf16.mxu0 0
        %953 = vmatmul.mubr.bf16.gmra.mxu0 %v796
        %v954 = vpop.f32.mrf.mxu0
        %v955 = vadd.f32 %v833, %v954
        %v956 = vpop.f32.mrf.mxu0
        %v957 = vadd.f32 %v837, %v956
        %v958 = vpop.f32.mrf.mxu0
        %v959 = vadd.f32 %v833, %v958
        %v960 = vpop.f32.mrf.mxu0
        %v961 = vadd.f32 %v837, %v960
        %962 = vmatprep.mubr.bf16.mxu0 0
        %963 = vmatmul.mubr.bf16.gmra.mxu0 %v797
        %v964 = vpop.f32.mrf.mxu0
        %v965 = vadd.f32 %v833, %v964
        %v966 = vpop.f32.mrf.mxu0
        %v967 = vadd.f32 %v837, %v966
        %v968 = vpop.f32.mrf.mxu0
        %v969 = vadd.f32 %v833, %v968
        %v970 = vpop.f32.mrf.mxu0
        %v971 = vadd.f32 %v837, %v970
        %972 = vmatprep.mubr.bf16.mxu0 0
        %973 = vmatmul.mubr.bf16.gmra.mxu0 %v798
        %v974 = vpop.f32.mrf.mxu0
        %v975 = vadd.f32 %v833, %v974
        %v976 = vpop.f32.mrf.mxu0
        %v977 = vadd.f32 %v837, %v976
        %v978 = vpop.f32.mrf.mxu0
        %v979 = vadd.f32 %v833, %v978
        %v980 = vpop.f32.mrf.mxu0
        %v981 = vadd.f32 %v837, %v980
        %982 = vmatprep.mubr.bf16.mxu0 0
        %983 = vmatmul.mubr.bf16.gmra.mxu0 %v799
        %v984 = vpop.f32.mrf.mxu0
        %v985 = vadd.f32 %v833, %v984
        %v986 = vpop.f32.mrf.mxu0
        %v987 = vadd.f32 %v837, %v986
        %v988 = vpop.f32.mrf.mxu0
        %v989 = vadd.f32 %v833, %v988
        %v990 = vpop.f32.mrf.mxu0
        %v991 = vadd.f32 %v837, %v990
        %992 = vmatprep.mubr.bf16.mxu0 0
        %993 = vmatmul.mubr.bf16.gmra.mxu0 %v800
        %v994 = vpop.f32.mrf.mxu0
        %v995 = vadd.f32 %v833, %v994
        %v996 = vpop.f32.mrf.mxu0
        %v997 = vadd.f32 %v837, %v996
        %v998 = vpop.f32.mrf.mxu0
        %v999 = vadd.f32 %v833, %v998
        %v1000 = vpop.f32.mrf.mxu0
        %v1001 = vadd.f32 %v837, %v1000
        %1002 = vmatprep.mubr.bf16.mxu0 0
        %1003 = vmatmul.mubr.bf16.gmra.mxu0 %v801
        %v1004 = vpop.f32.mrf.mxu0
        %v1005 = vadd.f32 %v833, %v1004
        %v1006 = vpop.f32.mrf.mxu0
        %v1007 = vadd.f32 %v837, %v1006
        %v1008 = vpop.f32.mrf.mxu0
        %v1009 = vadd.f32 %v833, %v1008
        %v1010 = vpop.f32.mrf.mxu0
        %v1011 = vadd.f32 %v837, %v1010
        %1012 = vmatprep.mubr.bf16.mxu0 0
        %1013 = vmatmul.mubr.bf16.gmra.mxu0 %v802
        %v1014 = vpop.f32.mrf.mxu0
        %v1015 = vadd.f32 %v833, %v1014
        %v1016 = vpop.f32.mrf.mxu0
        %v1017 = vadd.f32 %v837, %v1016
        %v1018 = vpop.f32.mrf.mxu0
        %v1019 = vadd.f32 %v833, %v1018
        %v1020 = vpop.f32.mrf.mxu0
        %v1021 = vadd.f32 %v837, %v1020
        %1022 = vmatprep.mubr.bf16.mxu0 0
        %1023 = vmatmul.mubr.bf16.gmra.mxu0 %v803
        %v1024 = vpop.f32.mrf.mxu0
        %v1025 = vadd.f32 %v833, %v1024
        %v1026 = vpop.f32.mrf.mxu0
        %v1027 = vadd.f32 %v837, %v1026
        %v1028 = vpop.f32.mrf.mxu0
        %v1029 = vadd.f32 %v833, %v1028
        %v1030 = vpop.f32.mrf.mxu0
        %v1031 = vadd.f32 %v837, %v1030
        %1032 = vmatprep.mubr.bf16.mxu0 0
        %1033 = vmatmul.mubr.bf16.gmra.mxu0 %v804
        %v1034 = vpop.f32.mrf.mxu0
        %v1035 = vadd.f32 %v833, %v1034
        %v1036 = vpop.f32.mrf.mxu0
        %v1037 = vadd.f32 %v837, %v1036
        %v1038 = vpop.f32.mrf.mxu0
        %v1039 = vadd.f32 %v833, %v1038
        %v1040 = vpop.f32.mrf.mxu0
        %v1041 = vadd.f32 %v837, %v1040
        %1042 = vmatprep.mubr.bf16.mxu0 0
        %1043 = vmatmul.mubr.bf16.gmra.mxu0 %v805
        %v1044 = vpop.f32.mrf.mxu0
        %v1045 = vadd.f32 %v833, %v1044
        %v1046 = vpop.f32.mrf.mxu0
        %v1047 = vadd.f32 %v837, %v1046
        %v1048 = vpop.f32.mrf.mxu0
        %v1049 = vadd.f32 %v833, %v1048
        %v1050 = vpop.f32.mrf.mxu0
        %v1051 = vadd.f32 %v837, %v1050
        %1052 = vmatprep.mubr.bf16.mxu0 0
        %1053 = vmatmul.mubr.bf16.gmra.mxu0 %v806
        %v1054 = vpop.f32.mrf.mxu0
        %v1055 = vadd.f32 %v833, %v1054
        %v1056 = vpop.f32.mrf.mxu0
        %v1057 = vadd.f32 %v837, %v1056
        %v1058 = vpop.f32.mrf.mxu0
        %v1059 = vadd.f32 %v833, %v1058
        %v1060 = vpop.f32.mrf.mxu0
        %v1061 = vadd.f32 %v837, %v1060
        %1062 = vmatprep.mubr.bf16.mxu0 0
        %1063 = vmatmul.mubr.bf16.gmra.mxu0 %v807
        %v1064 = vpop.f32.mrf.mxu0
        %v1065 = vadd.f32 %v833, %v1064
        %v1066 = vpop.f32.mrf.mxu0
        %v1067 = vadd.f32 %v837, %v1066
        %v1068 = vpop.f32.mrf.mxu0
        %v1069 = vadd.f32 %v833, %v1068
        %v1070 = vpop.f32.mrf.mxu0
        %v1071 = vadd.f32 %v837, %v1070
        %1072 = vmatprep.mubr.bf16.mxu0 0
        %1073 = vmatmul.mubr.bf16.gmra.mxu0 %v808
        %v1074 = vpop.f32.mrf.mxu0
        %v1075 = vadd.f32 %v833, %v1074
        %v1076 = vpop.f32.mrf.mxu0
        %v1077 = vadd.f32 %v837, %v1076
        %v1078 = vpop.f32.mrf.mxu0
        %v1079 = vadd.f32 %v833, %v1078
        %v1080 = vpop.f32.mrf.mxu0
        %v1081 = vadd.f32 %v837, %v1080
        %1082 = vmatprep.mubr.bf16.mxu0 0
        %1083 = vmatmul.mubr.bf16.gmra.mxu0 %v809
        %v1084 = vpop.f32.mrf.mxu0
        %v1085 = vadd.f32 %v833, %v1084
        %v1086 = vpop.f32.mrf.mxu0
        %v1087 = vadd.f32 %v837, %v1086
        %v1088 = vpop.f32.mrf.mxu0
        %v1089 = vadd.f32 %v833, %v1088
        %v1090 = vpop.f32.mrf.mxu0
        %v1091 = vadd.f32 %v837, %v1090
        %1092 = vmatprep.mubr.bf16.mxu0 0
        %1093 = vmatmul.mubr.bf16.gmra.mxu0 %v810
        %v1094 = vpop.f32.mrf.mxu0
        %v1095 = vadd.f32 %v833, %v1094
        %v1096 = vpop.f32.mrf.mxu0
        %v1097 = vadd.f32 %v837, %v1096
        %v1098 = vpop.f32.mrf.mxu0
        %v1099 = vadd.f32 %v833, %v1098
        %v1100 = vpop.f32.mrf.mxu0
        %v1101 = vadd.f32 %v837, %v1100
        %1102 = vmatprep.mubr.bf16.mxu0 0
        %1103 = vmatmul.mubr.bf16.gmra.mxu0 %v811
        %v1104 = vpop.f32.mrf.mxu0
        %v1105 = vadd.f32 %v833, %v1104
        %v1106 = vpop.f32.mrf.mxu0
        %v1107 = vadd.f32 %v837, %v1106
        %v1108 = vpop.f32.mrf.mxu0
        %v1109 = vadd.f32 %v833, %v1108
        %v1110 = vpop.f32.mrf.mxu0
        %v1111 = vadd.f32 %v837, %v1110
        %1112 = vdwg.mxu0
        %v1113 = vxor.u32 %v955, 2147483648
        %v1114 = vxor.u32 %v957, 2147483648
        %v1115 = vxor.u32 %v959, 2147483648
        %v1116 = vxor.u32 %v961, 2147483648
        %v1117 = vxor.u32 %v965, 2147483648
        %v1118 = vxor.u32 %v967, 2147483648
        %v1119 = vxor.u32 %v969, 2147483648
        %v1120 = vxor.u32 %v971, 2147483648
        %v1121 = vxor.u32 %v975, 2147483648
        %v1122 = vxor.u32 %v977, 2147483648
        %v1123 = vxor.u32 %v979, 2147483648
        %v1124 = vxor.u32 %v981, 2147483648
        %v1125 = vxor.u32 %v985, 2147483648
        %v1126 = vxor.u32 %v987, 2147483648
        %v1127 = vxor.u32 %v989, 2147483648
        %v1128 = vxor.u32 %v991, 2147483648
        %v1129 = vxor.u32 %v995, 2147483648
        %v1130 = vxor.u32 %v997, 2147483648
        %v1131 = vxor.u32 %v999, 2147483648
        %v1132 = vxor.u32 %v1001, 2147483648
        %v1133 = vxor.u32 %v1005, 2147483648
        %v1134 = vxor.u32 %v1007, 2147483648
        %v1135 = vxor.u32 %v1009, 2147483648
        %v1136 = vxor.u32 %v1011, 2147483648
        %v1137 = vxor.u32 %v1015, 2147483648
        %v1138 = vxor.u32 %v1017, 2147483648
        %v1139 = vxor.u32 %v1019, 2147483648
        %v1140 = vxor.u32 %v1021, 2147483648
        %v1141 = vxor.u32 %v1025, 2147483648
        %v1142 = vxor.u32 %v1027, 2147483648
        %v1143 = vxor.u32 %v1029, 2147483648
        %v1144 = vxor.u32 %v1031, 2147483648
        %v1145 = vxor.u32 %v1035, 2147483648
        %v1146 = vxor.u32 %v1037, 2147483648
        %v1147 = vxor.u32 %v1039, 2147483648
        %v1148 = vxor.u32 %v1041, 2147483648
        %v1149 = vxor.u32 %v1045, 2147483648
        %v1150 = vxor.u32 %v1047, 2147483648
        %v1151 = vxor.u32 %v1049, 2147483648
        %v1152 = vxor.u32 %v1051, 2147483648
        %v1153 = vxor.u32 %v1055, 2147483648
        %v1154 = vxor.u32 %v1057, 2147483648
        %v1155 = vxor.u32 %v1059, 2147483648
        %v1156 = vxor.u32 %v1061, 2147483648
        %v1157 = vxor.u32 %v1065, 2147483648
        %v1158 = vxor.u32 %v1067, 2147483648
        %v1159 = vxor.u32 %v1069, 2147483648
        %v1160 = vxor.u32 %v1071, 2147483648
        %v1161 = vxor.u32 %v1075, 2147483648
        %v1162 = vxor.u32 %v1077, 2147483648
        %v1163 = vxor.u32 %v1079, 2147483648
        %v1164 = vxor.u32 %v1081, 2147483648
        %v1165 = vxor.u32 %v1085, 2147483648
        %v1166 = vxor.u32 %v1087, 2147483648
        %v1167 = vxor.u32 %v1089, 2147483648
        %v1168 = vxor.u32 %v1091, 2147483648
        %v1169 = vxor.u32 %v1095, 2147483648
        %v1170 = vxor.u32 %v1097, 2147483648
        %v1171 = vxor.u32 %v1099, 2147483648
        %v1172 = vxor.u32 %v1101, 2147483648
        %v1173 = vxor.u32 %v1105, 2147483648
        %v1174 = vxor.u32 %v1107, 2147483648
        %v1175 = vxor.u32 %v1109, 2147483648
        %v1176 = vxor.u32 %v1111, 2147483648
        %v1177 = vmul.f32 %v1113, 1.442695
        %v1178 = vpow.pop %v1177
        %v1179 = vmul.f32 %v1114, 1.442695
        %v1180 = vpow.pop %v1179
        %v1181 = vmul.f32 %v1115, 1.442695
        %v1182 = vpow.pop %v1181
        %v1183 = vmul.f32 %v1116, 1.442695
        %v1184 = vpow.pop %v1183
        %v1185 = vmul.f32 %v1117, 1.442695
        %v1186 = vpow.pop %v1185
        %v1187 = vmul.f32 %v1118, 1.442695
        %v1188 = vpow.pop %v1187
        %v1189 = vmul.f32 %v1119, 1.442695
        %v1190 = vpow.pop %v1189
        %v1191 = vmul.f32 %v1120, 1.442695
        %v1192 = vpow.pop %v1191
        %v1193 = vmul.f32 %v1121, 1.442695
        %v1194 = vpow.pop %v1193
        %v1195 = vmul.f32 %v1122, 1.442695
        %v1196 = vpow.pop %v1195
        %v1197 = vmul.f32 %v1123, 1.442695
        %v1198 = vpow.pop %v1197
        %v1199 = vmul.f32 %v1124, 1.442695
        %v1200 = vpow.pop %v1199
        %v1201 = vmul.f32 %v1125, 1.442695
        %v1202 = vpow.pop %v1201
        %v1203 = vmul.f32 %v1126, 1.442695
        %v1204 = vpow.pop %v1203
        %v1205 = vmul.f32 %v1127, 1.442695
        %v1206 = vpow.pop %v1205
        %v1207 = vmul.f32 %v1128, 1.442695
        %v1208 = vpow.pop %v1207
        %v1209 = vmul.f32 %v1129, 1.442695
        %v1210 = vpow.pop %v1209
        %v1211 = vmul.f32 %v1130, 1.442695
        %v1212 = vpow.pop %v1211
        %v1213 = vmul.f32 %v1131, 1.442695
        %v1214 = vpow.pop %v1213
        %v1215 = vmul.f32 %v1132, 1.442695
        %v1216 = vpow.pop %v1215
        %v1217 = vmul.f32 %v1133, 1.442695
        %v1218 = vpow.pop %v1217
        %v1219 = vmul.f32 %v1134, 1.442695
        %v1220 = vpow.pop %v1219
        %v1221 = vmul.f32 %v1135, 1.442695
        %v1222 = vpow.pop %v1221
        %v1223 = vmul.f32 %v1136, 1.442695
        %v1224 = vpow.pop %v1223
        %v1225 = vmul.f32 %v1137, 1.442695
        %v1226 = vpow.pop %v1225
        %v1227 = vmul.f32 %v1138, 1.442695
        %v1228 = vpow.pop %v1227
        %v1229 = vmul.f32 %v1139, 1.442695
        %v1230 = vpow.pop %v1229
        %v1231 = vmul.f32 %v1140, 1.442695
        %v1232 = vpow.pop %v1231
        %v1233 = vmul.f32 %v1141, 1.442695
        %v1234 = vpow.pop %v1233
        %v1235 = vmul.f32 %v1142, 1.442695
        %v1236 = vpow.pop %v1235
        %v1237 = vmul.f32 %v1143, 1.442695
        %v1238 = vpow.pop %v1237
        %v1239 = vmul.f32 %v1144, 1.442695
        %v1240 = vpow.pop %v1239
        %v1241 = vmul.f32 %v1145, 1.442695
        %v1242 = vpow.pop %v1241
        %v1243 = vmul.f32 %v1146, 1.442695
        %v1244 = vpow.pop %v1243
        %v1245 = vmul.f32 %v1147, 1.442695
        %v1246 = vpow.pop %v1245
        %v1247 = vmul.f32 %v1148, 1.442695
        %v1248 = vpow.pop %v1247
        %v1249 = vmul.f32 %v1149, 1.442695
        %v1250 = vpow.pop %v1249
        %v1251 = vmul.f32 %v1150, 1.442695
        %v1252 = vpow.pop %v1251
        %v1253 = vmul.f32 %v1151, 1.442695
        %v1254 = vpow.pop %v1253
        %v1255 = vmul.f32 %v1152, 1.442695
        %v1256 = vpow.pop %v1255
        %v1257 = vmul.f32 %v1153, 1.442695
        %v1258 = vpow.pop %v1257
        %v1259 = vmul.f32 %v1154, 1.442695
        %v1260 = vpow.pop %v1259
        %v1261 = vmul.f32 %v1155, 1.442695
        %v1262 = vpow.pop %v1261
        %v1263 = vmul.f32 %v1156, 1.442695
        %v1264 = vpow.pop %v1263
        %v1265 = vmul.f32 %v1157, 1.442695
        %v1266 = vpow.pop %v1265
        %v1267 = vmul.f32 %v1158, 1.442695
        %v1268 = vpow.pop %v1267
        %v1269 = vmul.f32 %v1159, 1.442695
        %v1270 = vpow.pop %v1269
        %v1271 = vmul.f32 %v1160, 1.442695
        %v1272 = vpow.pop %v1271
        %v1273 = vmul.f32 %v1161, 1.442695
        %v1274 = vpow.pop %v1273
        %v1275 = vmul.f32 %v1162, 1.442695
        %v1276 = vpow.pop %v1275
        %v1277 = vmul.f32 %v1163, 1.442695
        %v1278 = vpow.pop %v1277
        %v1279 = vmul.f32 %v1164, 1.442695
        %v1280 = vpow.pop %v1279
        %v1281 = vmul.f32 %v1165, 1.442695
        %v1282 = vpow.pop %v1281
        %v1283 = vmul.f32 %v1166, 1.442695
        %v1284 = vpow.pop %v1283
        %v1285 = vmul.f32 %v1167, 1.442695
        %v1286 = vpow.pop %v1285
        %v1287 = vmul.f32 %v1168, 1.442695
        %v1288 = vpow.pop %v1287
        %v1289 = vmul.f32 %v1169, 1.442695
        %v1290 = vpow.pop %v1289
        %v1291 = vmul.f32 %v1170, 1.442695
        %v1292 = vpow.pop %v1291
        %v1293 = vmul.f32 %v1171, 1.442695
        %v1294 = vpow.pop %v1293
        %v1295 = vmul.f32 %v1172, 1.442695
        %v1296 = vpow.pop %v1295
        %v1297 = vmul.f32 %v1173, 1.442695
        %v1298 = vpow.pop %v1297
        %v1299 = vmul.f32 %v1174, 1.442695
        %v1300 = vpow.pop %v1299
        %v1301 = vmul.f32 %v1175, 1.442695
        %v1302 = vpow.pop %v1301
        %v1303 = vmul.f32 %v1176, 1.442695
        %v1304 = vpow.pop %v1303
        %v1305 = vadd.f32 %v1178, 1.0
        %v1306 = vadd.f32 %v1180, 1.0
        %v1307 = vadd.f32 %v1182, 1.0
        %v1308 = vadd.f32 %v1184, 1.0
        %v1309 = vadd.f32 %v1186, 1.0
        %v1310 = vadd.f32 %v1188, 1.0
        %v1311 = vadd.f32 %v1190, 1.0
        %v1312 = vadd.f32 %v1192, 1.0
        %v1313 = vadd.f32 %v1194, 1.0
        %v1314 = vadd.f32 %v1196, 1.0
        %v1315 = vadd.f32 %v1198, 1.0
        %v1316 = vadd.f32 %v1200, 1.0
        %v1317 = vadd.f32 %v1202, 1.0
        %v1318 = vadd.f32 %v1204, 1.0
        %v1319 = vadd.f32 %v1206, 1.0
        %v1320 = vadd.f32 %v1208, 1.0
        %v1321 = vadd.f32 %v1210, 1.0
        %v1322 = vadd.f32 %v1212, 1.0
        %v1323 = vadd.f32 %v1214, 1.0
        %v1324 = vadd.f32 %v1216, 1.0
        %v1325 = vadd.f32 %v1218, 1.0
        %v1326 = vadd.f32 %v1220, 1.0
        %v1327 = vadd.f32 %v1222, 1.0
        %v1328 = vadd.f32 %v1224, 1.0
        %v1329 = vadd.f32 %v1226, 1.0
        %v1330 = vadd.f32 %v1228, 1.0
        %v1331 = vadd.f32 %v1230, 1.0
        %v1332 = vadd.f32 %v1232, 1.0
        %v1333 = vadd.f32 %v1234, 1.0
        %v1334 = vadd.f32 %v1236, 1.0
        %v1335 = vadd.f32 %v1238, 1.0
        %v1336 = vadd.f32 %v1240, 1.0
        %v1337 = vadd.f32 %v1242, 1.0
        %v1338 = vadd.f32 %v1244, 1.0
        %v1339 = vadd.f32 %v1246, 1.0
        %v1340 = vadd.f32 %v1248, 1.0
        %v1341 = vadd.f32 %v1250, 1.0
        %v1342 = vadd.f32 %v1252, 1.0
        %v1343 = vadd.f32 %v1254, 1.0
        %v1344 = vadd.f32 %v1256, 1.0
        %v1345 = vadd.f32 %v1258, 1.0
        %v1346 = vadd.f32 %v1260, 1.0
        %v1347 = vadd.f32 %v1262, 1.0
        %v1348 = vadd.f32 %v1264, 1.0
        %v1349 = vadd.f32 %v1266, 1.0
        %v1350 = vadd.f32 %v1268, 1.0
        %v1351 = vadd.f32 %v1270, 1.0
        %v1352 = vadd.f32 %v1272, 1.0
        %v1353 = vadd.f32 %v1274, 1.0
        %v1354 = vadd.f32 %v1276, 1.0
        %v1355 = vadd.f32 %v1278, 1.0
        %v1356 = vadd.f32 %v1280, 1.0
        %v1357 = vadd.f32 %v1282, 1.0
        %v1358 = vadd.f32 %v1284, 1.0
        %v1359 = vadd.f32 %v1286, 1.0
        %v1360 = vadd.f32 %v1288, 1.0
        %v1361 = vadd.f32 %v1290, 1.0
        %v1362 = vadd.f32 %v1292, 1.0
        %v1363 = vadd.f32 %v1294, 1.0
        %v1364 = vadd.f32 %v1296, 1.0
        %v1365 = vadd.f32 %v1298, 1.0
        %v1366 = vadd.f32 %v1300, 1.0
        %v1367 = vadd.f32 %v1302, 1.0
        %v1368 = vadd.f32 %v1304, 1.0
        %v1369 = vrcp.pop %v1305
        %v1370 = vmul.f32 1.0, %v1369
        %v1371 = vrcp.pop %v1306
        %v1372 = vmul.f32 1.0, %v1371
        %v1373 = vrcp.pop %v1307
        %v1374 = vmul.f32 1.0, %v1373
        %v1375 = vrcp.pop %v1308
        %v1376 = vmul.f32 1.0, %v1375
        %v1377 = vrcp.pop %v1309
        %v1378 = vmul.f32 1.0, %v1377
        %v1379 = vrcp.pop %v1310
        %v1380 = vmul.f32 1.0, %v1379
        %v1381 = vrcp.pop %v1311
        %v1382 = vmul.f32 1.0, %v1381
        %v1383 = vrcp.pop %v1312
        %v1384 = vmul.f32 1.0, %v1383
        %v1385 = vrcp.pop %v1313
        %v1386 = vmul.f32 1.0, %v1385
        %v1387 = vrcp.pop %v1314
        %v1388 = vmul.f32 1.0, %v1387
        %v1389 = vrcp.pop %v1315
        %v1390 = vmul.f32 1.0, %v1389
        %v1391 = vrcp.pop %v1316
        %v1392 = vmul.f32 1.0, %v1391
        %v1393 = vrcp.pop %v1317
        %v1394 = vmul.f32 1.0, %v1393
        %v1395 = vrcp.pop %v1318
        %v1396 = vmul.f32 1.0, %v1395
        %v1397 = vrcp.pop %v1319
        %v1398 = vmul.f32 1.0, %v1397
        %v1399 = vrcp.pop %v1320
        %v1400 = vmul.f32 1.0, %v1399
        %v1401 = vrcp.pop %v1321
        %v1402 = vmul.f32 1.0, %v1401
        %v1403 = vrcp.pop %v1322
        %v1404 = vmul.f32 1.0, %v1403
        %v1405 = vrcp.pop %v1323
        %v1406 = vmul.f32 1.0, %v1405
        %v1407 = vrcp.pop %v1324
        %v1408 = vmul.f32 1.0, %v1407
        %v1409 = vrcp.pop %v1325
        %v1410 = vmul.f32 1.0, %v1409
        %v1411 = vrcp.pop %v1326
        %v1412 = vmul.f32 1.0, %v1411
        %v1413 = vrcp.pop %v1327
        %v1414 = vmul.f32 1.0, %v1413
        %v1415 = vrcp.pop %v1328
        %v1416 = vmul.f32 1.0, %v1415
        %v1417 = vrcp.pop %v1329
        %v1418 = vmul.f32 1.0, %v1417
        %v1419 = vrcp.pop %v1330
        %v1420 = vmul.f32 1.0, %v1419
        %v1421 = vrcp.pop %v1331
        %v1422 = vmul.f32 1.0, %v1421
        %v1423 = vrcp.pop %v1332
        %v1424 = vmul.f32 1.0, %v1423
        %v1425 = vrcp.pop %v1333
        %v1426 = vmul.f32 1.0, %v1425
        %v1427 = vrcp.pop %v1334
        %v1428 = vmul.f32 1.0, %v1427
        %v1429 = vrcp.pop %v1335
        %v1430 = vmul.f32 1.0, %v1429
        %v1431 = vrcp.pop %v1336
        %v1432 = vmul.f32 1.0, %v1431
        %v1433 = vrcp.pop %v1337
        %v1434 = vmul.f32 1.0, %v1433
        %v1435 = vrcp.pop %v1338
        %v1436 = vmul.f32 1.0, %v1435
        %v1437 = vrcp.pop %v1339
        %v1438 = vmul.f32 1.0, %v1437
        %v1439 = vrcp.pop %v1340
        %v1440 = vmul.f32 1.0, %v1439
        %v1441 = vrcp.pop %v1341
        %v1442 = vmul.f32 1.0, %v1441
        %v1443 = vrcp.pop %v1342
        %v1444 = vmul.f32 1.0, %v1443
        %v1445 = vrcp.pop %v1343
        %v1446 = vmul.f32 1.0, %v1445
        %v1447 = vrcp.pop %v1344
        %v1448 = vmul.f32 1.0, %v1447
        %v1449 = vrcp.pop %v1345
        %v1450 = vmul.f32 1.0, %v1449
        %v1451 = vrcp.pop %v1346
        %v1452 = vmul.f32 1.0, %v1451
        %v1453 = vrcp.pop %v1347
        %v1454 = vmul.f32 1.0, %v1453
        %v1455 = vrcp.pop %v1348
        %v1456 = vmul.f32 1.0, %v1455
        %v1457 = vrcp.pop %v1349
        %v1458 = vmul.f32 1.0, %v1457
        %v1459 = vrcp.pop %v1350
        %v1460 = vmul.f32 1.0, %v1459
        %v1461 = vrcp.pop %v1351
        %v1462 = vmul.f32 1.0, %v1461
        %v1463 = vrcp.pop %v1352
        %v1464 = vmul.f32 1.0, %v1463
        %v1465 = vrcp.pop %v1353
        %v1466 = vmul.f32 1.0, %v1465
        %v1467 = vrcp.pop %v1354
        %v1468 = vmul.f32 1.0, %v1467
        %v1469 = vrcp.pop %v1355
        %v1470 = vmul.f32 1.0, %v1469
        %v1471 = vrcp.pop %v1356
        %v1472 = vmul.f32 1.0, %v1471
        %v1473 = vrcp.pop %v1357
        %v1474 = vmul.f32 1.0, %v1473
        %v1475 = vrcp.pop %v1358
        %v1476 = vmul.f32 1.0, %v1475
        %v1477 = vrcp.pop %v1359
        %v1478 = vmul.f32 1.0, %v1477
        %v1479 = vrcp.pop %v1360
        %v1480 = vmul.f32 1.0, %v1479
        %v1481 = vrcp.pop %v1361
        %v1482 = vmul.f32 1.0, %v1481
        %v1483 = vrcp.pop %v1362
        %v1484 = vmul.f32 1.0, %v1483
        %v1485 = vrcp.pop %v1363
        %v1486 = vmul.f32 1.0, %v1485
        %v1487 = vrcp.pop %v1364
        %v1488 = vmul.f32 1.0, %v1487
        %v1489 = vrcp.pop %v1365
        %v1490 = vmul.f32 1.0, %v1489
        %v1491 = vrcp.pop %v1366
        %v1492 = vmul.f32 1.0, %v1491
        %v1493 = vrcp.pop %v1367
        %v1494 = vmul.f32 1.0, %v1493
        %v1495 = vrcp.pop %v1368
        %v1496 = vmul.f32 1.0, %v1495
        %1497 = vst [vmem:[%s272] sm:$0xff] %v1370
        %1498 = vst [vmem:[%s272 + $0x8] sm:$0xff] %v1372
        %1499 = vst [vmem:[%s272 + $0x10] sm:$0xff] %v1374
        %1500 = vst [vmem:[%s272 + $0x18] sm:$0xff] %v1376
        %1501 = vst [vmem:[%s272 + $0x20] sm:$0xff] %v1378
        %1502 = vst [vmem:[%s272 + $0x28] sm:$0xff] %v1380
        %1503 = vst [vmem:[%s272 + $0x30] sm:$0xff] %v1382
        %1504 = vst [vmem:[%s272 + $0x38] sm:$0xff] %v1384
        %1505 = vst [vmem:[%s272 + $0x40] sm:$0xff] %v1386
        %1506 = vst [vmem:[%s272 + $0x48] sm:$0xff] %v1388
        %1507 = vst [vmem:[%s272 + $0x50] sm:$0xff] %v1390
        %1508 = vst [vmem:[%s272 + $0x58] sm:$0xff] %v1392
        %1509 = vst [vmem:[%s272 + $0x60] sm:$0xff] %v1394
        %1510 = vst [vmem:[%s272 + $0x68] sm:$0xff] %v1396
        %1511 = vst [vmem:[%s272 + $0x70] sm:$0xff] %v1398
        %1512 = vst [vmem:[%s272 + $0x78] sm:$0xff] %v1400
        %1513 = vst [vmem:[%s272 + $0x80] sm:$0xff] %v1402
        %1514 = vst [vmem:[%s272 + $0x88] sm:$0xff] %v1404
        %1515 = vst [vmem:[%s272 + $0x90] sm:$0xff] %v1406
        %1516 = vst [vmem:[%s272 + $0x98] sm:$0xff] %v1408
        %1517 = vst [vmem:[%s272 + $0xa0] sm:$0xff] %v1410
        %1518 = vst [vmem:[%s272 + $0xa8] sm:$0xff] %v1412
        %1519 = vst [vmem:[%s272 + $0xb0] sm:$0xff] %v1414
        %1520 = vst [vmem:[%s272 + $0xb8] sm:$0xff] %v1416
        %1521 = vst [vmem:[%s272 + $0xc0] sm:$0xff] %v1418
        %1522 = vst [vmem:[%s272 + $0xc8] sm:$0xff] %v1420
        %1523 = vst [vmem:[%s272 + $0xd0] sm:$0xff] %v1422
        %1524 = vst [vmem:[%s272 + $0xd8] sm:$0xff] %v1424
        %1525 = vst [vmem:[%s272 + $0xe0] sm:$0xff] %v1426
        %1526 = vst [vmem:[%s272 + $0xe8] sm:$0xff] %v1428
        %1527 = vst [vmem:[%s272 + $0xf0] sm:$0xff] %v1430
        %1528 = vst [vmem:[%s272 + $0xf8] sm:$0xff] %v1432
        %1529 = vst [vmem:[%s272 + $0x100] sm:$0xff] %v1434
        %1530 = vst [vmem:[%s272 + $0x108] sm:$0xff] %v1436
        %1531 = vst [vmem:[%s272 + $0x110] sm:$0xff] %v1438
        %1532 = vst [vmem:[%s272 + $0x118] sm:$0xff] %v1440
        %1533 = vst [vmem:[%s272 + $0x120] sm:$0xff] %v1442
        %1534 = vst [vmem:[%s272 + $0x128] sm:$0xff] %v1444
        %1535 = vst [vmem:[%s272 + $0x130] sm:$0xff] %v1446
        %1536 = vst [vmem:[%s272 + $0x138] sm:$0xff] %v1448
        %1537 = vst [vmem:[%s272 + $0x140] sm:$0xff] %v1450
        %1538 = vst [vmem:[%s272 + $0x148] sm:$0xff] %v1452
        %1539 = vst [vmem:[%s272 + $0x150] sm:$0xff] %v1454
        %1540 = vst [vmem:[%s272 + $0x158] sm:$0xff] %v1456
        %1541 = vst [vmem:[%s272 + $0x160] sm:$0xff] %v1458
        %1542 = vst [vmem:[%s272 + $0x168] sm:$0xff] %v1460
        %1543 = vst [vmem:[%s272 + $0x170] sm:$0xff] %v1462
        %1544 = vst [vmem:[%s272 + $0x178] sm:$0xff] %v1464
        %1545 = vst [vmem:[%s272 + $0x180] sm:$0xff] %v1466
        %1546 = vst [vmem:[%s272 + $0x188] sm:$0xff] %v1468
        %1547 = vst [vmem:[%s272 + $0x190] sm:$0xff] %v1470
        %1548 = vst [vmem:[%s272 + $0x198] sm:$0xff] %v1472
        %1549 = vst [vmem:[%s272 + $0x1a0] sm:$0xff] %v1474
        %1550 = vst [vmem:[%s272 + $0x1a8] sm:$0xff] %v1476
        %1551 = vst [vmem:[%s272 + $0x1b0] sm:$0xff] %v1478
        %1552 = vst [vmem:[%s272 + $0x1b8] sm:$0xff] %v1480
        %1553 = vst [vmem:[%s272 + $0x1c0] sm:$0xff] %v1482
        %1554 = vst [vmem:[%s272 + $0x1c8] sm:$0xff] %v1484
        %1555 = vst [vmem:[%s272 + $0x1d0] sm:$0xff] %v1486
        %1556 = vst [vmem:[%s272 + $0x1d8] sm:$0xff] %v1488
        %1557 = vst [vmem:[%s272 + $0x1e0] sm:$0xff] %v1490
        %1558 = vst [vmem:[%s272 + $0x1e8] sm:$0xff] %v1492
        %1559 = vst [vmem:[%s272 + $0x1f0] sm:$0xff] %v1494
        %1560 = vst [vmem:[%s272 + $0x1f8] sm:$0xff] %v1496
        %s1561 = sand.u32 %s141, 1
        %s1562 = scalar_lea.sflag [#allocation4], %s1561
        %s1563 = sand.u32 %s141, 1
        %s1564 = smul.addr %s1563, 512
        %s1565 = scalar_lea.vmem [#allocation8], %s1564
        // Predicated region
        $region53: #{tpu_custom_call.1} parent=39 // pred_check
          %p1566 = pneg %p151
        $region54: #{tpu_custom_call.1} parent=39 // pred_check_branch
          %1568 = sbr.rel (%p1566) target = $region56
        $region55: #{tpu_custom_call.1} parent=39 // pred_region
          %s1569 = smul.u32 32, %s23
          %s1571 = ssub.s32 8192, 8192
          %1572 = vsyncadd %s1562, %s1571
          %s1573 = smul.addr %s1569, 2
          %s1574 = smul.addr %s1573, 128
          %s1575 = scalar_lea.hbm %s5, %s1574
          %s1576 = sshll.u32 %s1565, 4
          %s1577 = int_to_ptr.vmem [resolvable:$true] %s1576
          %1582 = dma.vmem_to_hbm [thread:$0]  %s1577, 8192, %s1575, %s1562, 256, 256, 16
        $region56: #{tpu_custom_call.1} parent=39 // pred_fallthru
          _
      $region40: #{tpu_custom_call.1} parent=5 // pred_fallthru
        _
      %p1583 = scmp.le.s32.totalorder 2, %s18
      // Predicated region
      $region57: #{tpu_custom_call.1} parent=5 // pred_check
        %p1584 = pneg %p1583
      $region58: #{tpu_custom_call.1} parent=5 // pred_check_branch
        %1586 = sbr.rel (%p1584) target = $region60
      $region59: #{tpu_custom_call.1} parent=5 // pred_region
        %s1587 = ssub.s32 %s18, 2
        // Predicated region
        $region61: #{tpu_custom_call.1} parent=59 // pred_check
          %p1588 = pneg %p157
        $region62: #{tpu_custom_call.1} parent=59 // pred_check_branch
          %1590 = sbr.rel (%p1588) target = $region64
        $region63: #{tpu_custom_call.1} parent=59 // pred_region
          %s1591 = sand.u32 %s142, 1
          %s1592 = scalar_lea.sflag [#allocation4], %s1591
          %s1593 = sand.u32 %s142, 1
          %s1594 = smul.addr %s1593, 512
          %s1595 = scalar_lea.vmem [#allocation8], %s1594
          %1596 = dma.done %s1592, 8192
        $region64: #{tpu_custom_call.1} parent=59 // pred_fallthru
          _
      $region60: #{tpu_custom_call.1} parent=5 // pred_fallthru
        _
    $region6: #{tpu_custom_call.1} parent=1 // loop_footer
      %s22 = sadd.s32 1, %s18
    $region7: #{tpu_custom_call.1} parent=1 // loop_footer_branch
      %17 = sbr.rel target = $region3
    $region8: #{tpu_custom_call.1} parent=1 // loop_exit
      _
    %1597 = vsyncpa [#allocation3], 1
    %s1598 = scalar_lea.sflag [#allocation3], 1
    %1599 = vsyncpa %s1598, 1
    %1600 = vsyncpa [#allocation6], 1
    %1601 = vsyncpa [#allocation4], 1
    %s1602 = scalar_lea.sflag [#allocation4], 1
    %1603 = vsyncpa %s1602, 1

</llo_original>
